<compile_context>
chip_gen: v7x
topology: tpu7x:2x2x1
jax: 0.10.0
libtpu: 0.0.40
codegen_flags: <defaults>
</compile_context>

<pallas_src>
import jax
import jax.numpy as jnp
from jax.experimental import pallas as pl
from jax.experimental.pallas import tpu as pltpu

LANE = 128           # lane-dense classifier output width (dense, unmasked vst)
MAX_TILE_N = 4096    # row-tile cap; double-buffered footprint ~3 MiB at C=32
LN_EPS = 1e-5        # PyTorch nn.LayerNorm default


def _layernorm(x, w, b, eps=LN_EPS):
    # PyTorch nn.LayerNorm: biased variance over the last dim.
    mean = jnp.mean(x, axis=-1, keepdims=True)
    var = jnp.mean((x - mean) ** 2, axis=-1, keepdims=True)
    return (x - mean) * jax.lax.rsqrt(var + eps) * w + b


def basic_linear_kernel(x_ref, w1_ref, n1w_ref, n1b_ref, w2_ref,
                        wc_ref, bc_ref, out_ref):
    # layer1: (TN, C) @ (C, H). bf16 operands, f32 MXU accumulation.
    x = x_ref[...].astype(jnp.bfloat16)
    h = jnp.dot(x, w1_ref[...], preferred_element_type=jnp.float32)

    # norm1 (f32, with affine)
    h = _layernorm(h, n1w_ref[...], n1b_ref[...])

    # residual: h + layer2(h)
    h = h + jnp.dot(h.astype(jnp.bfloat16), w2_ref[...],
                    preferred_element_type=jnp.float32)

    # norm2: normalization only — its affine is folded into wc_ref / bc_ref.
    mean = jnp.mean(h, axis=-1, keepdims=True)
    var = jnp.mean((h - mean) ** 2, axis=-1, keepdims=True)
    hn = (h - mean) * jax.lax.rsqrt(var + LN_EPS)

    # classifier (+ folded norm2 affine): (TN, H) @ (H, 128) + (1, 128)
    logits = jnp.dot(hn.astype(jnp.bfloat16), wc_ref[...],
                     preferred_element_type=jnp.float32) + bc_ref[...]

    # bf16 writeback halves the dominant HBM store traffic.
    out_ref[...] = logits.astype(out_ref.dtype)


def _choose_tile_n(n_rows, max_tile=MAX_TILE_N, target_steps=8):
    """Pick the row tile: as large as possible to amortize per-step overhead,
    but keep >= target_steps grid steps for big inputs (v7x has 2 TensorCores
    sharing the 'parallel' grid axis) and keep rows sublane-legal (mult. of 8
    or the full array extent)."""
    if n_rows <= 128:
        if n_rows % 8 == 0:
            return int(n_rows)               # exact block(s), no ragged tail
        return int(min(((n_rows + 7) // 8) * 8, 128))
    t = pl.cdiv(n_rows, target_steps)
    t = ((t + 127) // 128) * 128             # round rows up to 128
    return int(max(128, min(max_tile, t)))


def basic_linear_forward(x, params, *, classes, max_tile_n=MAX_TILE_N):
    """x: (..., C) float32.  Returns logits (..., classes) float32."""
    lead = x.shape[:-1]
    C = x.shape[-1]
    x2d = x.reshape(-1, C)
    N = x2d.shape[0]

    H = params["w1"].shape[1]
    cls_pad = params["wc_fold"].shape[1]      # 128-lane padded classifier width
    tile_n = _choose_tile_n(N, max_tile_n)
    grid = (pl.cdiv(N, tile_n),)              # ragged last block handled by Pallas

    const2 = lambda i: (0, 0)                 # params stay VMEM-resident
    out = pl.pallas_call(
        basic_linear_kernel,
        out_shape=jax.ShapeDtypeStruct((N, cls_pad), jnp.bfloat16),
        grid=grid,
        in_specs=[
            pl.BlockSpec((tile_n, C), lambda i: (i, 0)),   # x tile (pipelined)
            pl.BlockSpec((C, H), const2),                  # layer1 weight (bf16)
            pl.BlockSpec((1, H), const2),                  # norm1 weight
            pl.BlockSpec((1, H), const2),                  # norm1 bias
            pl.BlockSpec((H, H), const2),                  # layer2 weight (bf16)
            pl.BlockSpec((H, cls_pad), const2),            # classifier w (norm2-folded)
            pl.BlockSpec((1, cls_pad), const2),            # classifier bias (folded)
        ],
        out_specs=pl.BlockSpec((tile_n, cls_pad), lambda i: (i, 0)),
        compiler_params=pltpu.CompilerParams(
            dimension_semantics=("parallel",),             # megacore sharding
            vmem_limit_bytes=48 * 1024 * 1024,             # safe on v5e/v6e/v7x
        ),
    )(
        x2d,
        params["w1"], params["n1_w"], params["n1_b"],
        params["w2"], params["wc_fold"], params["bc_fold"],
    )
    # NOTE: junk rows of a ragged last block are never written back; only the
    # real classes are kept (cast back to f32 for the module's contract).
    return out[:, :classes].astype(jnp.float32).reshape(*lead, classes)


def basic_linear_ref(x, params, *, classes):
    """Pure-JAX f32 reference of BasicLinear.forward (unfolded norm2)."""
    w1 = params["w1"].astype(jnp.float32)
    w2 = params["w2"].astype(jnp.float32)
    wc = params["wc"]
    h = x @ w1
    h = _layernorm(h, params["n1_w"], params["n1_b"])
    h = h + h @ w2
    h = _layernorm(h, params["n2_w"], params["n2_b"])
    return h @ wc


def init_params(key, in_channels, hidden_channels, classes):
    """Matches BasicLinear._init_weights: Linear weights ~ trunc_normal(std=0.02)
    (all Linear layers bias-free); LayerNorm weight=1, bias=0.  Linear weights
    stored transposed (in, out); matmul weights stored bf16.  norm2's affine is
    folded into the classifier, which is zero-padded to 128 output lanes."""
    C, H = in_channels, hidden_channels
    k1, k2, k3 = jax.random.split(key, 3)

    def tn(k, shape):
        # TODO(synk): PyTorch trunc_normal_(std=0.02) truncates at |x|<=2
        # (~+/-100 sigma); this truncates at +/-2 sigma. Init-only difference.
        return (jax.random.truncated_normal(k, -2.0, 2.0, shape) * 0.02
                ).astype(jnp.float32)

    w1 = tn(k1, (C, H))
    w2 = tn(k2, (H, H))
    wc = tn(k3, (H, classes))
    n1_w = jnp.ones((1, H), jnp.float32)
    n1_b = jnp.zeros((1, H), jnp.float32)
    n2_w = jnp.ones((1, H), jnp.float32)
    n2_b = jnp.zeros((1, H), jnp.float32)

    # Fold norm2's affine into the classifier:
    #   (hn * n2_w + n2_b) @ wc == hn @ (n2_w[:,None] * wc) + (n2_b @ wc)
    wc_fold = n2_w.reshape(H, 1) * wc               # (H, classes)
    bc_fold = n2_b @ wc                             # (1, classes)
    wc_pad = jnp.zeros((H, LANE), jnp.float32).at[:, :classes].set(wc_fold)
    bc_pad = jnp.zeros((1, LANE), jnp.float32).at[:, :classes].set(bc_fold)

    return {
        # kernel-ready
        "w1": w1.astype(jnp.bfloat16),
        "n1_w": n1_w, "n1_b": n1_b,
        "w2": w2.astype(jnp.bfloat16),
        "wc_fold": wc_pad.astype(jnp.bfloat16),
        "bc_fold": bc_pad,
        # raw copies for the pure-JAX reference
        "wc": wc, "n2_w": n2_w, "n2_b": n2_b,
    }


if __name__ == "__main__":
    # Small config consistent with the module: C=32, H=16, classes=10.
    in_channels, hidden_channels, classes = 32, 16, 10
    batch, seq = 2, 8

    key = jax.random.PRNGKey(0)
    kx, kp = jax.random.split(key)
    x = jax.random.normal(kx, (batch, seq, in_channels), jnp.float32)
    params = init_params(kp, in_channels, hidden_channels, classes)

    out = basic_linear_forward(x, params, classes=classes)
    jax.block_until_ready(out)
    assert out.shape == (batch, seq, classes), out.shape

    ref = basic_linear_ref(x, params, classes=classes)
    err = float(jnp.max(jnp.abs(out - ref)))
    assert err < 5e-2, f"max |kernel - ref| = {err}"
    print("KERNEL_OK")
</pallas_src>

<mosaic_0001>
module attributes {stable_mosaic.version = 11 : i64} {
  func.func @basic_linear_kernel(%arg0: i32, %arg1: memref<16x32xf32, #tpu.memory_space<vmem>>, %arg2: memref<32x16xbf16, #tpu.memory_space<vmem>>, %arg3: memref<1x16xf32, #tpu.memory_space<vmem>>, %arg4: memref<1x16xf32, #tpu.memory_space<vmem>>, %arg5: memref<16x16xbf16, #tpu.memory_space<vmem>>, %arg6: memref<16x128xbf16, #tpu.memory_space<vmem>>, %arg7: memref<1x128xf32, #tpu.memory_space<vmem>>, %arg8: memref<16x128xbf16, #tpu.memory_space<vmem>>) attributes {dimension_semantics = [#tpu.dimension_semantics<parallel>], iteration_bounds = array<i64: 1>, scalar_prefetch = 0 : i64, scratch_operands = 0 : i64, tpu.core_type = #tpu.core_type<tc>, window_params = [{transform_indices = @transform_0, window_bounds = array<i64: 16, 32>}, {pipeline_mode = #tpu.pipeline_mode<synchronous>, transform_indices = @transform_1, window_bounds = array<i64: 32, 16>}, {pipeline_mode = #tpu.pipeline_mode<synchronous>, transform_indices = @transform_2, window_bounds = array<i64: 1, 16>}, {pipeline_mode = #tpu.pipeline_mode<synchronous>, transform_indices = @transform_3, window_bounds = array<i64: 1, 16>}, {pipeline_mode = #tpu.pipeline_mode<synchronous>, transform_indices = @transform_4, window_bounds = array<i64: 16, 16>}, {pipeline_mode = #tpu.pipeline_mode<synchronous>, transform_indices = @transform_5, window_bounds = array<i64: 16, 128>}, {pipeline_mode = #tpu.pipeline_mode<synchronous>, transform_indices = @transform_6, window_bounds = array<i64: 1, 128>}, {transform_indices = @transform_7, window_bounds = array<i64: 16, 128>}]} {
    %c0 = arith.constant 0 : index
    %c0_0 = arith.constant 0 : index
    %0 = vector.load %arg1[%c0, %c0_0] : memref<16x32xf32, #tpu.memory_space<vmem>>, vector<16x32xf32>
    %1 = arith.truncf %0 : vector<16x32xf32> to vector<16x32xbf16>
    %c0_1 = arith.constant 0 : index
    %c0_2 = arith.constant 0 : index
    %2 = vector.load %arg2[%c0_1, %c0_2] : memref<32x16xbf16, #tpu.memory_space<vmem>>, vector<32x16xbf16>
    %cst = arith.constant dense<0.000000e+00> : vector<16x16xf32>
    %3 = tpu.matmul %1, %2, %cst {dimension_numbers = #tpu.dot_dimension_numbers<[1], [0], [0], [1], [0, 0, 1, 1], [], []>} : vector<16x32xbf16>, vector<32x16xbf16>, vector<16x16xf32> -> vector<16x16xf32>
    %c0_3 = arith.constant 0 : index
    %c0_4 = arith.constant 0 : index
    %4 = vector.load %arg3[%c0_3, %c0_4] : memref<1x16xf32, #tpu.memory_space<vmem>>, vector<1x16xf32>
    %c0_5 = arith.constant 0 : index
    %c0_6 = arith.constant 0 : index
    %5 = vector.load %arg4[%c0_5, %c0_6] : memref<1x16xf32, #tpu.memory_space<vmem>>, vector<1x16xf32>
    %cst_7 = arith.constant dense<0.000000e+00> : vector<16xf32>
    %6 = vector.multi_reduction <add>, %3, %cst_7 [1] : vector<16x16xf32> to vector<16xf32>
    %7 = vector.shape_cast %6 : vector<16xf32> to vector<16x1xf32>
    %cst_8 = arith.constant 1.600000e+01 : f32
    %8 = vector.broadcast %cst_8 : f32 to vector<16x1xf32>
    %9 = arith.divf %7, %8 : vector<16x1xf32>
    %10 = vector.broadcast %9 : vector<16x1xf32> to vector<16x16xf32>
    %11 = arith.subf %3, %10 : vector<16x16xf32>
    %12 = arith.mulf %11, %11 : vector<16x16xf32>
    %cst_9 = arith.constant dense<0.000000e+00> : vector<16xf32>
    %13 = vector.multi_reduction <add>, %12, %cst_9 [1] : vector<16x16xf32> to vector<16xf32>
    %14 = vector.shape_cast %13 : vector<16xf32> to vector<16x1xf32>
    %cst_10 = arith.constant 1.600000e+01 : f32
    %15 = vector.broadcast %cst_10 : f32 to vector<16x1xf32>
    %16 = arith.divf %14, %15 : vector<16x1xf32>
    %17 = vector.broadcast %9 : vector<16x1xf32> to vector<16x16xf32>
    %18 = arith.subf %3, %17 : vector<16x16xf32>
    %cst_11 = arith.constant 9.99999974E-6 : f32
    %19 = vector.broadcast %cst_11 : f32 to vector<16x1xf32>
    %20 = arith.addf %16, %19 : vector<16x1xf32>
    %21 = math.rsqrt %20 : vector<16x1xf32>
    %22 = vector.broadcast %21 : vector<16x1xf32> to vector<16x16xf32>
    %23 = arith.mulf %18, %22 : vector<16x16xf32>
    %24 = vector.broadcast %4 : vector<1x16xf32> to vector<16x16xf32>
    %25 = arith.mulf %23, %24 : vector<16x16xf32>
    %26 = vector.broadcast %5 : vector<1x16xf32> to vector<16x16xf32>
    %27 = arith.addf %25, %26 : vector<16x16xf32>
    %28 = arith.truncf %27 : vector<16x16xf32> to vector<16x16xbf16>
    %c0_12 = arith.constant 0 : index
    %c0_13 = arith.constant 0 : index
    %29 = vector.load %arg5[%c0_12, %c0_13] : memref<16x16xbf16, #tpu.memory_space<vmem>>, vector<16x16xbf16>
    %cst_14 = arith.constant dense<0.000000e+00> : vector<16x16xf32>
    %30 = tpu.matmul %28, %29, %cst_14 {dimension_numbers = #tpu.dot_dimension_numbers<[1], [0], [0], [1], [0, 0, 1, 1], [], []>} : vector<16x16xbf16>, vector<16x16xbf16>, vector<16x16xf32> -> vector<16x16xf32>
    %31 = arith.addf %27, %30 : vector<16x16xf32>
    %cst_15 = arith.constant dense<0.000000e+00> : vector<16xf32>
    %32 = vector.multi_reduction <add>, %31, %cst_15 [1] : vector<16x16xf32> to vector<16xf32>
    %33 = vector.shape_cast %32 : vector<16xf32> to vector<16x1xf32>
    %cst_16 = arith.constant 1.600000e+01 : f32
    %34 = vector.broadcast %cst_16 : f32 to vector<16x1xf32>
    %35 = arith.divf %33, %34 : vector<16x1xf32>
    %36 = vector.broadcast %35 : vector<16x1xf32> to vector<16x16xf32>
    %37 = arith.subf %31, %36 : vector<16x16xf32>
    %38 = arith.mulf %37, %37 : vector<16x16xf32>
    %cst_17 = arith.constant dense<0.000000e+00> : vector<16xf32>
    %39 = vector.multi_reduction <add>, %38, %cst_17 [1] : vector<16x16xf32> to vector<16xf32>
    %40 = vector.shape_cast %39 : vector<16xf32> to vector<16x1xf32>
    %cst_18 = arith.constant 1.600000e+01 : f32
    %41 = vector.broadcast %cst_18 : f32 to vector<16x1xf32>
    %42 = arith.divf %40, %41 : vector<16x1xf32>
    %43 = vector.broadcast %35 : vector<16x1xf32> to vector<16x16xf32>
    %44 = arith.subf %31, %43 : vector<16x16xf32>
    %cst_19 = arith.constant 9.99999974E-6 : f32
    %45 = vector.broadcast %cst_19 : f32 to vector<16x1xf32>
    %46 = arith.addf %42, %45 : vector<16x1xf32>
    %47 = math.rsqrt %46 : vector<16x1xf32>
    %48 = vector.broadcast %47 : vector<16x1xf32> to vector<16x16xf32>
    %49 = arith.mulf %44, %48 : vector<16x16xf32>
    %50 = arith.truncf %49 : vector<16x16xf32> to vector<16x16xbf16>
    %c0_20 = arith.constant 0 : index
    %c0_21 = arith.constant 0 : index
    %51 = vector.load %arg6[%c0_20, %c0_21] : memref<16x128xbf16, #tpu.memory_space<vmem>>, vector<16x128xbf16>
    %cst_22 = arith.constant dense<0.000000e+00> : vector<16x128xf32>
    %52 = tpu.matmul %50, %51, %cst_22 {dimension_numbers = #tpu.dot_dimension_numbers<[1], [0], [0], [1], [0, 0, 1, 1], [], []>} : vector<16x16xbf16>, vector<16x128xbf16>, vector<16x128xf32> -> vector<16x128xf32>
    %c0_23 = arith.constant 0 : index
    %c0_24 = arith.constant 0 : index
    %53 = vector.load %arg7[%c0_23, %c0_24] : memref<1x128xf32, #tpu.memory_space<vmem>>, vector<1x128xf32>
    %54 = vector.broadcast %53 : vector<1x128xf32> to vector<16x128xf32>
    %55 = arith.addf %52, %54 : vector<16x128xf32>
    %56 = arith.truncf %55 : vector<16x128xf32> to vector<16x128xbf16>
    %c0_25 = arith.constant 0 : index
    %c0_26 = arith.constant 0 : index
    %57 = vector.load %arg8[%c0_25, %c0_26] : memref<16x128xbf16, #tpu.memory_space<vmem>>, vector<16x128xbf16>
    tpu.vector_store %arg8[%c0_25, %c0_26], %56 {strides = array<i32>} : memref<16x128xbf16, #tpu.memory_space<vmem>>, vector<16x128xbf16>,
    return
  }
  func.func @transform_0(%arg0: i32) -> (i32, i32) {
    %c0_i32 = arith.constant 0 : i32
    %c0_i32_0 = arith.constant 0 : i32
    return %arg0, %c0_i32 : i32, i32
  }
  func.func @transform_1(%arg0: i32) -> (i32, i32) {
    %c0_i32 = arith.constant 0 : i32
    %c0_i32_0 = arith.constant 0 : i32
    %c0_i32_1 = arith.constant 0 : i32
    return %c0_i32, %c0_i32_0 : i32, i32
  }
  func.func @transform_2(%arg0: i32) -> (i32, i32) {
    %c0_i32 = arith.constant 0 : i32
    %c0_i32_0 = arith.constant 0 : i32
    %c0_i32_1 = arith.constant 0 : i32
    return %c0_i32, %c0_i32_0 : i32, i32
  }
  func.func @transform_3(%arg0: i32) -> (i32, i32) {
    %c0_i32 = arith.constant 0 : i32
    %c0_i32_0 = arith.constant 0 : i32
    %c0_i32_1 = arith.constant 0 : i32
    return %c0_i32, %c0_i32_0 : i32, i32
  }
  func.func @transform_4(%arg0: i32) -> (i32, i32) {
    %c0_i32 = arith.constant 0 : i32
    %c0_i32_0 = arith.constant 0 : i32
    %c0_i32_1 = arith.constant 0 : i32
    return %c0_i32, %c0_i32_0 : i32, i32
  }
  func.func @transform_5(%arg0: i32) -> (i32, i32) {
    %c0_i32 = arith.constant 0 : i32
    %c0_i32_0 = arith.constant 0 : i32
    %c0_i32_1 = arith.constant 0 : i32
    return %c0_i32, %c0_i32_0 : i32, i32
  }
  func.func @transform_6(%arg0: i32) -> (i32, i32) {
    %c0_i32 = arith.constant 0 : i32
    %c0_i32_0 = arith.constant 0 : i32
    %c0_i32_1 = arith.constant 0 : i32
    return %c0_i32, %c0_i32_0 : i32, i32
  }
  func.func @transform_7(%arg0: i32) -> (i32, i32) {
    %c0_i32 = arith.constant 0 : i32
    %c0_i32_0 = arith.constant 0 : i32
    return %arg0, %c0_i32 : i32, i32
  }
}

</mosaic_0001>

<llo_original>
// kernel: tpu_custom_call.1
$region0: #{tpu_custom_call.1}
  #allocation0 [shape = 'u32[]', space=smem, size = 0x4, offset = 0x4, fixed_abs, tag = 'smem constant byte address 0x4 - core index']
  #allocation1 [shape = 'u32[144,128]{1,0:T(1,128)}', space=vmem, size = 0x12000, scoped, tag = 'internal scratch']
  %s0 = inlined_call_operand.vmem [shape: f32[16,32], index: 0, kind: input, shape index: {}]
  %s1 = inlined_call_operand.vmem [shape: bf16[32,16], index: 1, kind: input, shape index: {}]
  %s2 = inlined_call_operand.vmem [shape: f32[1,16], index: 2, kind: input, shape index: {}]
  %s3 = inlined_call_operand.vmem [shape: f32[1,16], index: 3, kind: input, shape index: {}]
  %s4 = inlined_call_operand.vmem [shape: bf16[16,16], index: 4, kind: input, shape index: {}]
  %s5 = inlined_call_operand.vmem [shape: bf16[16,128], index: 5, kind: input, shape index: {}]
  %s6 = inlined_call_operand.vmem [shape: f32[1,128], index: 6, kind: input, shape index: {}]
  %s7 = inlined_call_operand.hbm [shape: bf16[16,128], index: 7, kind: output, shape index: {}]
  %s8 = sld [smem:[#allocation0]]
  $region38: #{tpu_custom_call.1} parent=0
    _
  %s10 = ssub.s32 1, %s8
  %s11 = scalar_select 0, %s10, %s8
  $region1: #{tpu_custom_call.1} parent=0
    #allocation2 [shape = 'u8[4096]{0}', space=vmem, size = 0x1000, scoped, tag = 'output window, operand 0, single buffered']
    #allocation3 [shape = 's32[1]{0}', space=sflag, size = 0x4, scoped, tag = 'scoped memory for tpu_custom_call.1']
    %12 = vsyncpa [#allocation3], 0
    // Predicated region
    $region2: #{tpu_custom_call.1} parent=1 // pred_check
      _
    $region3: #{tpu_custom_call.1} parent=1 // pred_check_branch
      %14 = sbr.rel (0) target = $region5
    $region4: #{tpu_custom_call.1} parent=1 // pred_region
      _
    $region5: #{tpu_custom_call.1} parent=1 // pred_fallthru
      _
    // Predicated region
    $region6: #{tpu_custom_call.1} parent=1 // pred_check
      _
    $region7: #{tpu_custom_call.1} parent=1 // pred_check_branch
      %16 = sbr.rel (0) target = $region9
    $region8: #{tpu_custom_call.1} parent=1 // pred_region
      _
    $region9: #{tpu_custom_call.1} parent=1 // pred_fallthru
      _
    // Predicated region
    $region10: #{tpu_custom_call.1} parent=1 // pred_check
      _
    $region11: #{tpu_custom_call.1} parent=1 // pred_check_branch
      %18 = sbr.rel (0) target = $region13
    $region12: #{tpu_custom_call.1} parent=1 // pred_region
      _
    $region13: #{tpu_custom_call.1} parent=1 // pred_fallthru
      _
    // Predicated region
    $region14: #{tpu_custom_call.1} parent=1 // pred_check
      _
    $region15: #{tpu_custom_call.1} parent=1 // pred_check_branch
      %20 = sbr.rel (0) target = $region17
    $region16: #{tpu_custom_call.1} parent=1 // pred_region
      _
    $region17: #{tpu_custom_call.1} parent=1 // pred_fallthru
      _
    // Predicated region
    $region18: #{tpu_custom_call.1} parent=1 // pred_check
      _
    $region19: #{tpu_custom_call.1} parent=1 // pred_check_branch
      %22 = sbr.rel (0) target = $region21
    $region20: #{tpu_custom_call.1} parent=1 // pred_region
      _
    $region21: #{tpu_custom_call.1} parent=1 // pred_fallthru
      _
    // Predicated region
    $region22: #{tpu_custom_call.1} parent=1 // pred_check
      _
    $region23: #{tpu_custom_call.1} parent=1 // pred_check_branch
      %24 = sbr.rel (0) target = $region25
    $region24: #{tpu_custom_call.1} parent=1 // pred_region
      _
    $region25: #{tpu_custom_call.1} parent=1 // pred_fallthru
      _
    // Predicated region
    $region26: #{tpu_custom_call.1} parent=1 // pred_check
      _
    $region27: #{tpu_custom_call.1} parent=1 // pred_check_branch
      %26 = sbr.rel (0) target = $region29
    $region28: #{tpu_custom_call.1} parent=1 // pred_region
      _
    $region29: #{tpu_custom_call.1} parent=1 // pred_fallthru
      _
    %v28 = vld [vmem:[%s0] sm:$0xff]
    %v29 = vld [vmem:[%s0 + $0x8] sm:$0xff]
    %v30 = vpack.c.bf16 %v29, %v28
    %v31 = vld [vmem:[%s1] sm:$0xf]
    %v32 = vld [vmem:[%s1 + $0x4] sm:$0xf]
    %v33 = vld [vmem:[%s1 + $0x8] sm:$0xf]
    %v34 = vld [vmem:[%s1 + $0xc] sm:$0xf]
    %v39 = vunpack.c.l.b16 %v31
    %v40 = vunpack.c.l.b16 %v32
    %v41 = vunpack.c.l.b16 %v33
    %v42 = vunpack.c.l.b16 %v34
    %v43 = vpack.c.b16 %v40, %v39
    %v44 = vpack.c.b16 %v42, %v41
    %vm47 = vcmask 261120
    %v49 = vsel %vm47, %v30, 0
    %51 = vmatprep.subr.bf16.mxu0 0
    %52 = vmatpush1.bf16.msra.mxu0 %v43
    %53 = vmatprep.subr.bf16.mxu0 0
    %54 = vmatpush1.bf16.msra.mxu0 %v44
    %55 = vmatprep.subr.bf16.mxu0 0
    %56 = vmatpush1.bf16.msra.mxu0 0
    %57 = vmatprep.subr.bf16.mxu0 0
    %58 = vmatpush1.bf16.msra.mxu0 0
    %59 = vmatprep.subr.bf16.mxu0 0
    %60 = vmatpush1.bf16.msra.mxu0 0
    %61 = vmatprep.subr.bf16.mxu0 0
    %62 = vmatpush1.bf16.msra.mxu0 0
    %63 = vmatprep.subr.bf16.mxu0 0
    %64 = vmatpush1.bf16.msra.mxu0 0
    %65 = vmatprep.subr.bf16.mxu0 0
    %66 = vmatpush1.bf16.msra.mxu0 0
    %67 = vmatprep.subr.bf16.mxu0 0
    %68 = vmatpush1.bf16.msra.mxu0 0
    %69 = vmatprep.subr.bf16.mxu0 0
    %70 = vmatpush1.bf16.msra.mxu0 0
    %71 = vmatprep.subr.bf16.mxu0 0
    %72 = vmatpush1.bf16.msra.mxu0 0
    %73 = vmatprep.subr.bf16.mxu0 0
    %74 = vmatpush1.bf16.msra.mxu0 0
    %75 = vmatprep.subr.bf16.mxu0 0
    %76 = vmatpush1.bf16.msra.mxu0 0
    %77 = vmatprep.subr.bf16.mxu0 0
    %78 = vmatpush1.bf16.msra.mxu0 0
    %79 = vmatprep.subr.bf16.mxu0 0
    %80 = vmatpush1.bf16.msra.mxu0 0
    %81 = vmatprep.subr.bf16.mxu0 0
    %82 = vmatpush1.bf16.msra.mxu0 0
    %83 = vmatprep.mubr.bf16.mxu0 0
    %84 = vmatmul.mubr.bf16.gmra.mrb[0].mxu0 %v49
    %v85 = vpop.f32.mrb[0].mxu0
    %v86 = vadd.f32 0.0, %v85
    %v87 = vpop.f32.mrb[0].mxu0
    %v88 = vpop.f32.mrb[0].mxu0
    %v89 = vadd.f32 0.0, %v88
    %v90 = vpop.f32.mrb[0].mxu0
    %91 = vdwg.mxu0
    %v92 = vld [vmem:[%s2] sm:$0x1]
    %v93 = vld [vmem:[%s3] sm:$0x1]
    %vm94 = vcmask 130048
    %v95 = vsel %vm94, %v86, 0.0
    %96 = vadd.xlane.f32.xlu0 %v95
    %v97 = vpop.xlane.xlu0 %96
    %v98 = vsel %vm94, %v89, 0.0
    %99 = vadd.xlane.f32.xlu0 %v98
    %v100 = vpop.xlane.xlu0 %99
    %v101 = vrcp.pop 16.0
    %v102 = vmul.f32 %v97, %v101
    %v103 = vmul.f32 %v100, %v101
    %v104 = vsub.f32 %v86, %v102
    %v105 = vsub.f32 %v89, %v103
    %v106 = vmul.f32 %v104, %v104
    %v107 = vmul.f32 %v105, %v105
    %v108 = vsel %vm94, %v106, 0.0
    %109 = vadd.xlane.f32.xlu0 %v108
    %v110 = vpop.xlane.xlu0 %109
    %v111 = vsel %vm94, %v107, 0.0
    %112 = vadd.xlane.f32.xlu0 %v111
    %v113 = vpop.xlane.xlu0 %112
    %v114 = vmul.f32 %v110, %v101
    %v115 = vmul.f32 %v113, %v101
    %v116 = vadd.f32 %v114, 1e-05
    %v117 = vadd.f32 %v115, 1e-05
    %v118 = vrsqrt.pop %v116
    %v119 = vrsqrt.pop %v117
    %v120 = vmul.f32 %v104, %v118
    %v121 = vmul.f32 %v105, %v119
    %v123 = vlaneseq
    %v124 = vshrl.u32 %v123, 7
    %v125 = vsub.s32 0, %v124
    %v126 = vrot.slane %v92, %v125
    %v128 = vmul.f32 %v120, %v126
    %v129 = vmul.f32 %v121, %v126
    %v131 = vlaneseq
    %v132 = vshrl.u32 %v131, 7
    %v133 = vsub.s32 0, %v132
    %v134 = vrot.slane %v93, %v133
    %v136 = vadd.f32 %v128, %v134
    %v137 = vadd.f32 %v129, %v134
    %v138 = vpack.c.bf16 %v137, %v136
    %v139 = vld [vmem:[%s4] sm:$0xf]
    %v140 = vld [vmem:[%s4 + $0x4] sm:$0xf]
    %v143 = vunpack.c.l.b16 %v139
    %v144 = vunpack.c.l.b16 %v140
    %v145 = vpack.c.b16 %v144, %v143
    %v148 = vsel %vm94, %v138, 0
    %150 = vmatprep.subr.bf16.mxu0 0
    %151 = vmatpush1.bf16.msra.mxu0 %v145
    %152 = vmatprep.subr.bf16.mxu0 0
    %153 = vmatpush1.bf16.msra.mxu0 0
    %154 = vmatprep.subr.bf16.mxu0 0
    %155 = vmatpush1.bf16.msra.mxu0 0
    %156 = vmatprep.subr.bf16.mxu0 0
    %157 = vmatpush1.bf16.msra.mxu0 0
    %158 = vmatprep.subr.bf16.mxu0 0
    %159 = vmatpush1.bf16.msra.mxu0 0
    %160 = vmatprep.subr.bf16.mxu0 0
    %161 = vmatpush1.bf16.msra.mxu0 0
    %162 = vmatprep.subr.bf16.mxu0 0
    %163 = vmatpush1.bf16.msra.mxu0 0
    %164 = vmatprep.subr.bf16.mxu0 0
    %165 = vmatpush1.bf16.msra.mxu0 0
    %166 = vmatprep.subr.bf16.mxu0 0
    %167 = vmatpush1.bf16.msra.mxu0 0
    %168 = vmatprep.subr.bf16.mxu0 0
    %169 = vmatpush1.bf16.msra.mxu0 0
    %170 = vmatprep.subr.bf16.mxu0 0
    %171 = vmatpush1.bf16.msra.mxu0 0
    %172 = vmatprep.subr.bf16.mxu0 0
    %173 = vmatpush1.bf16.msra.mxu0 0
    %174 = vmatprep.subr.bf16.mxu0 0
    %175 = vmatpush1.bf16.msra.mxu0 0
    %176 = vmatprep.subr.bf16.mxu0 0
    %177 = vmatpush1.bf16.msra.mxu0 0
    %178 = vmatprep.subr.bf16.mxu0 0
    %179 = vmatpush1.bf16.msra.mxu0 0
    %180 = vmatprep.subr.bf16.mxu0 0
    %181 = vmatpush1.bf16.msra.mxu0 0
    %182 = vmatprep.mubr.bf16.mxu0 0
    %183 = vmatmul.mubr.bf16.gmra.mrb[0].mxu0 %v148
    %v184 = vpop.f32.mrb[0].mxu0
    %v185 = vadd.f32 0.0, %v184
    %v186 = vpop.f32.mrb[0].mxu0
    %v187 = vpop.f32.mrb[0].mxu0
    %v188 = vadd.f32 0.0, %v187
    %v189 = vpop.f32.mrb[0].mxu0
    %190 = vdwg.mxu0
    %v191 = vadd.f32 %v136, %v185
    %v192 = vadd.f32 %v137, %v188
    %v193 = vsel %vm94, %v191, 0.0
    %194 = vadd.xlane.f32.xlu0 %v193
    %v195 = vpop.xlane.xlu0 %194
    %v196 = vsel %vm94, %v192, 0.0
    %197 = vadd.xlane.f32.xlu0 %v196
    %v198 = vpop.xlane.xlu0 %197
    %v199 = vmul.f32 %v195, %v101
    %v200 = vmul.f32 %v198, %v101
    %v201 = vsub.f32 %v191, %v199
    %v202 = vsub.f32 %v192, %v200
    %v203 = vmul.f32 %v201, %v201
    %v204 = vmul.f32 %v202, %v202
    %v205 = vsel %vm94, %v203, 0.0
    %206 = vadd.xlane.f32.xlu0 %v205
    %v207 = vpop.xlane.xlu0 %206
    %v208 = vsel %vm94, %v204, 0.0
    %209 = vadd.xlane.f32.xlu0 %v208
    %v210 = vpop.xlane.xlu0 %209
    %v211 = vmul.f32 %v207, %v101
    %v212 = vmul.f32 %v210, %v101
    %v213 = vadd.f32 %v211, 1e-05
    %v214 = vadd.f32 %v212, 1e-05
    %v215 = vrsqrt.pop %v213
    %v216 = vrsqrt.pop %v214
    %v217 = vmul.f32 %v201, %v215
    %v218 = vmul.f32 %v202, %v216
    %v219 = vpack.c.bf16 %v218, %v217
    %v220 = vld [vmem:[%s5] sm:$0xf]
    %v221 = vld [vmem:[%s5 + $0x4] sm:$0xf]
    %v222 = vld [vmem:[%s6] sm:$0x1]
    %v224 = vlaneseq
    %v225 = vshrl.u32 %v224, 7
    %v226 = vsub.s32 0, %v225
    %v227 = vrot.slane %v222, %v226
    %v231 = vunpack.c.l.b16 %v220
    %v232 = vunpack.c.l.b16 %v221
    %v233 = vpack.c.b16 %v232, %v231
    %v236 = vsel %vm94, %v219, 0
    %238 = vmatprep.subr.bf16.mxu0 0
    %239 = vmatpush1.bf16.msra.mxu0 %v233
    %240 = vmatprep.subr.bf16.mxu0 0
    %241 = vmatpush1.bf16.msra.mxu0 0
    %242 = vmatprep.subr.bf16.mxu0 0
    %243 = vmatpush1.bf16.msra.mxu0 0
    %244 = vmatprep.subr.bf16.mxu0 0
    %245 = vmatpush1.bf16.msra.mxu0 0
    %246 = vmatprep.subr.bf16.mxu0 0
    %247 = vmatpush1.bf16.msra.mxu0 0
    %248 = vmatprep.subr.bf16.mxu0 0
    %249 = vmatpush1.bf16.msra.mxu0 0
    %250 = vmatprep.subr.bf16.mxu0 0
    %251 = vmatpush1.bf16.msra.mxu0 0
    %252 = vmatprep.subr.bf16.mxu0 0
    %253 = vmatpush1.bf16.msra.mxu0 0
    %254 = vmatprep.subr.bf16.mxu0 0
    %255 = vmatpush1.bf16.msra.mxu0 0
    %256 = vmatprep.subr.bf16.mxu0 0
    %257 = vmatpush1.bf16.msra.mxu0 0
    %258 = vmatprep.subr.bf16.mxu0 0
    %259 = vmatpush1.bf16.msra.mxu0 0
    %260 = vmatprep.subr.bf16.mxu0 0
    %261 = vmatpush1.bf16.msra.mxu0 0
    %262 = vmatprep.subr.bf16.mxu0 0
    %263 = vmatpush1.bf16.msra.mxu0 0
    %264 = vmatprep.subr.bf16.mxu0 0
    %265 = vmatpush1.bf16.msra.mxu0 0
    %266 = vmatprep.subr.bf16.mxu0 0
    %267 = vmatpush1.bf16.msra.mxu0 0
    %268 = vmatprep.subr.bf16.mxu0 0
    %269 = vmatpush1.bf16.msra.mxu0 0
    %270 = vmatprep.mubr.bf16.mxu0 0
    %271 = vmatmul.mubr.bf16.gmra.mrb[0].mxu0 %v236
    %v272 = vpop.f32.mrb[0].mxu0
    %v273 = vadd.f32 %v227, %v272
    %v274 = vpop.f32.mrb[0].mxu0
    %v275 = vpop.f32.mrb[0].mxu0
    %v276 = vadd.f32 %v227, %v275
    %v277 = vpop.f32.mrb[0].mxu0
    %278 = vdwg.mxu0
    %v279 = vpack.c.bf16 %v276, %v273
    %v281 = vunpack.c.l.b16 %v279
    %v282 = vunpack.c.h.b16 %v279
    %v283 = vpack.c.b16 %v281, %v281
    %v284 = vpack.c.b16 %v282, %v282
    %287 = vst [vmem:[#allocation2] sm:$0xf] %v283
    %288 = vst [vmem:[#allocation2 + $0x4] sm:$0xf] %v284
    // Predicated region
    $region30: #{tpu_custom_call.1} parent=1 // pred_check
      _
    $region31: #{tpu_custom_call.1} parent=1 // pred_check_branch
      %290 = sbr.rel (0) target = $region33
    $region32: #{tpu_custom_call.1} parent=1 // pred_region
      %s292 = ssub.s32 128, 128
      %293 = vsyncadd [#allocation3], %s292
      %s294 = sshll.u32 [#allocation2], 4
      %s295 = int_to_ptr.vmem [resolvable:$true] %s294
      %300 = dma.vmem_to_hbm [thread:$0]  %s295, 128, %s7, [#allocation3], 64, 64, 4
    $region33: #{tpu_custom_call.1} parent=1 // pred_fallthru
      _
    // Predicated region
    $region34: #{tpu_custom_call.1} parent=1 // pred_check
      _
    $region35: #{tpu_custom_call.1} parent=1 // pred_check_branch
      %302 = sbr.rel (0) target = $region37
    $region36: #{tpu_custom_call.1} parent=1 // pred_region
      %303 = dma.done [#allocation3], 128
    $region37: #{tpu_custom_call.1} parent=1 // pred_fallthru
      _
    %304 = vsyncpa [#allocation3], 1

</llo_original>
